<compile_context>
chip_gen: v5e
topology: v5e:2x2
jax: 0.10.0
libtpu: 0.0.40
codegen_flags: <defaults>
</compile_context>

<pallas_src>
import functools
import math

import jax
import jax.numpy as jnp
from jax import lax
from jax.experimental import pallas as pl
from jax.experimental.pallas import tpu as pltpu


def _gc_block_kernel(B, N, F, eps, x_ref, att_ref, wgb_ref, o_ref):
    """Fused GC_Block forward, node-major layout.

    x_ref   : (N, B*F)      x transposed to node-major: x_t[n, b*F+f] = x[b,n,f]
    att_ref : (2, N, N)     attention matrix of each GCN layer
    wgb_ref : (2, F+2N, F)  per layer: rows [0:F) = W, [F:F+N) = gamma,
                            [F+N:F+2N) = beta (gamma/beta viewed as (N, F))
    o_ref   : (N, B*F)      output, same node-major layout
    """
    f32 = jnp.float32
    inv_b = 1.0 / B
    x = x_ref[...].astype(f32)                                # (N, B*F)

    def layer(y, l):
        att = att_ref[l]                                      # (N, N)
        w = wgb_ref[l, 0:F, :]                                # (F, F)
        gamma = wgb_ref[l, F:F + N, :]                        # (N, F)
        beta = wgb_ref[l, F + N:F + 2 * N, :]                 # (N, F)

        # GraphConvolution: support = input @ W, per batch on static F-wide
        # lane slices (exact B*N*F^2 MACs, no kron(I_B, W) padding waste).
        s = jnp.concatenate(
            [jnp.dot(y[:, b * F:(b + 1) * F], w, preferred_element_type=f32)
             for b in range(B)], axis=1)                      # (N, B*F)

        # output = att @ support for ALL batches with one 2-D MXU dot.
        u = jnp.dot(att, s, preferred_element_type=f32)       # (N, B*F)
        # GraphConvolution bias omitted: constant over the batch axis, so it
        # cancels exactly in the BatchNorm mean subtraction below.

        # BatchNorm1d(N*F), training mode: biased stats over the batch axis,
        # per (n, f), computed on the B lane slices (pure VPU math, same
        # summation order as the reference).
        parts = [u[:, b * F:(b + 1) * F] for b in range(B)]   # B x (N, F)
        mean = parts[0]
        for b in range(1, B):
            mean = mean + parts[b]
        mean = mean * inv_b
        devs = [p - mean for p in parts]
        var = devs[0] * devs[0]
        for b in range(1, B):
            var = var + devs[b] * devs[b]
        var = var * inv_b
        scale = gamma * lax.rsqrt(var + eps)                  # (N, F)

        # dropout -> identity (see TODO at top of file); tanh activation.
        return jnp.concatenate(
            [jnp.tanh(d * scale + beta) for d in devs], axis=1)   # (N, B*F)

    y = layer(x, 0)
    y = layer(y, 1)
    o_ref[...] = (y + x).astype(o_ref.dtype)


def pack_gc_block_params(params):
    """One-time, batch-independent packing into 2 small f32 buffers."""
    w1 = params["w1"].astype(jnp.float32)
    F = w1.shape[0]
    N = params["att1"].shape[0]
    att = jnp.stack([params["att1"], params["att2"]]).astype(jnp.float32)

    def pack_layer(w, g, be):
        return jnp.concatenate(
            [w.astype(jnp.float32),
             g.reshape(N, F).astype(jnp.float32),
             be.reshape(N, F).astype(jnp.float32)], axis=0)   # (F+2N, F)

    wgb = jnp.stack([pack_layer(params["w1"], params["g1"], params["be1"]),
                     pack_layer(params["w2"], params["g2"], params["be2"])])
    return att, wgb


def gc_block(x, att, wgb, eps=1e-5):
    B, N, F = x.shape
    # Relayout ONCE outside the kernel: (B, N, F) -> node-major (N, B*F).
    # (For a fused multi-block DANet stack, keep this layout end-to-end.)
    x_t = jnp.transpose(x, (1, 0, 2)).reshape(N, B * F)

    kernel = functools.partial(_gc_block_kernel, B, N, F, eps)
    vmem = pl.BlockSpec(memory_space=pltpu.MemorySpace.VMEM)

    # Advisory hint: only real MACs are counted (no zero blocks).
    flops = 2 * (2 * B * N * F * F + 2 * B * N * N * F)
    transcendentals = 2 * B * N * F + 2 * N * F              # tanh + rsqrt
    bytes_accessed = 4 * (2 * x_t.size + att.size + wgb.size)

    out_t = pl.pallas_call(
        kernel,
        out_shape=jax.ShapeDtypeStruct((N, B * F), x.dtype),
        in_specs=[vmem, vmem, vmem],
        out_specs=vmem,
        cost_estimate=pl.CostEstimate(
            flops=flops,
            transcendentals=transcendentals,
            bytes_accessed=bytes_accessed),
    )(x_t, att, wgb)
    return jnp.transpose(out_t.reshape(N, B, F), (1, 0, 2))


def init_params(key, in_features, node_n):
    """Deterministic synthetic parameters matching the PyTorch shapes."""
    stdv = 1.0 / math.sqrt(in_features)
    ks = jax.random.split(key, 10)

    def u(k, shape):
        return jax.random.uniform(k, shape, jnp.float32, -stdv, stdv)

    return dict(
        # GraphConvolution 1
        w1=u(ks[0], (in_features, in_features)),
        att1=u(ks[1], (node_n, node_n)),
        b1=u(ks[2], (1, in_features)),
        # BatchNorm1d 1 (gamma/beta are (node_n*F,) in torch; kept 2-D here)
        g1=1.0 + 0.1 * jax.random.normal(ks[3], (node_n, in_features), jnp.float32),
        be1=0.1 * jax.random.normal(ks[4], (node_n, in_features), jnp.float32),
        # GraphConvolution 2
        w2=u(ks[5], (in_features, in_features)),
        att2=u(ks[6], (node_n, node_n)),
        b2=u(ks[7], (1, in_features)),
        # BatchNorm1d 2
        g2=1.0 + 0.1 * jax.random.normal(ks[8], (node_n, in_features), jnp.float32),
        be2=0.1 * jax.random.normal(ks[9], (node_n, in_features), jnp.float32),
    )


def gc_block_reference(x, p, eps=1e-5):
    """Pure-JAX reference mirroring the PyTorch module (bias included)."""
    def gcn(inp, w, att, b):
        s = jnp.einsum("bnf,fg->bng", inp, w)
        o = jnp.einsum("nm,bmf->bnf", att, s)
        return o + b

    def bn(y, g, be):
        m = y.mean(0, keepdims=True)
        v = ((y - m) ** 2).mean(0, keepdims=True)
        return (y - m) / jnp.sqrt(v + eps) * g[None] + be[None]

    y = gcn(x, p["w1"], p["att1"], p["b1"])
    y = jnp.tanh(bn(y, p["g1"], p["be1"]))
    y = gcn(y, p["w2"], p["att2"], p["b2"])
    y = jnp.tanh(bn(y, p["g2"], p["be2"]))
    return y + x


if __name__ == "__main__":
    B, NODE_N, F = 2, 48, 16  # small shapes; node_n matches the module default
    key = jax.random.PRNGKey(0)
    kx, kp = jax.random.split(key)
    x = jax.random.normal(kx, (B, NODE_N, F), jnp.float32)
    params = init_params(kp, F, NODE_N)

    att, wgb = pack_gc_block_params(params)       # one-time, batch-independent
    out = jax.block_until_ready(gc_block(x, att, wgb))

    ref = gc_block_reference(x, params)
    assert out.shape == (B, NODE_N, F)
    max_err = float(jnp.max(jnp.abs(out - ref)))
    # BN with batch=2 can amplify last-ULP differences (rsqrt + folded affine)
    # by ~1/sqrt(eps); 1e-3 absolute still cleanly separates real bugs (O(1)).
    assert jnp.allclose(out, ref, rtol=1e-4, atol=1e-3), f"max abs err {max_err}"

    print("KERNEL_OK")
</pallas_src>

<mosaic_0001>
module attributes {stable_mosaic.version = 11 : i64} {
  func.func @_gc_block_kernel(%arg0: memref<48x32xf32, #tpu.memory_space<vmem>>, %arg1: memref<2x48x48xf32, #tpu.memory_space<vmem>>, %arg2: memref<2x112x16xf32, #tpu.memory_space<vmem>>, %arg3: memref<48x32xf32, #tpu.memory_space<vmem>>) attributes {dimension_semantics = [], scalar_prefetch = 0 : i64, scratch_operands = 0 : i64, tpu.core_type = #tpu.core_type<tc>} {
    %c0 = arith.constant 0 : index
    %c0_0 = arith.constant 0 : index
    %0 = vector.load %arg0[%c0, %c0_0] : memref<48x32xf32, #tpu.memory_space<vmem>>, vector<48x32xf32>
    %c0_1 = arith.constant 0 : index
    %c0_2 = arith.constant 0 : index
    %c0_3 = arith.constant 0 : index
    %1 = vector.load %arg1[%c0_1, %c0_2, %c0_3] : memref<2x48x48xf32, #tpu.memory_space<vmem>>, vector<1x48x48xf32>
    %2 = vector.shape_cast %1 : vector<1x48x48xf32> to vector<48x48xf32>
    %c0_4 = arith.constant 0 : index
    %c0_5 = arith.constant 0 : index
    %c0_6 = arith.constant 0 : index
    %3 = vector.load %arg2[%c0_4, %c0_5, %c0_6] : memref<2x112x16xf32, #tpu.memory_space<vmem>>, vector<1x16x16xf32>
    %4 = vector.shape_cast %3 : vector<1x16x16xf32> to vector<16x16xf32>
    %c0_7 = arith.constant 0 : index
    %c16 = arith.constant 16 : index
    %c0_8 = arith.constant 0 : index
    %5 = vector.load %arg2[%c0_7, %c16, %c0_8] : memref<2x112x16xf32, #tpu.memory_space<vmem>>, vector<1x48x16xf32>
    %6 = vector.shape_cast %5 : vector<1x48x16xf32> to vector<48x16xf32>
    %c0_9 = arith.constant 0 : index
    %c64 = arith.constant 64 : index
    %c0_10 = arith.constant 0 : index
    %7 = vector.load %arg2[%c0_9, %c64, %c0_10] : memref<2x112x16xf32, #tpu.memory_space<vmem>>, vector<1x48x16xf32>
    %8 = vector.shape_cast %7 : vector<1x48x16xf32> to vector<48x16xf32>
    %9 = vector.extract_strided_slice %0 {offsets = [0, 0], sizes = [48, 16], strides = [1, 1]} : vector<48x32xf32> to vector<48x16xf32>
    %cst = arith.constant dense<0.000000e+00> : vector<48x16xf32>
    %10 = tpu.matmul %9, %4, %cst {dimension_numbers = #tpu.dot_dimension_numbers<[1], [0], [0], [1], [0, 0, 1, 1], [], []>} : vector<48x16xf32>, vector<16x16xf32>, vector<48x16xf32> -> vector<48x16xf32>
    %11 = vector.extract_strided_slice %0 {offsets = [0, 16], sizes = [48, 16], strides = [1, 1]} : vector<48x32xf32> to vector<48x16xf32>
    %cst_11 = arith.constant dense<0.000000e+00> : vector<48x16xf32>
    %12 = tpu.matmul %11, %4, %cst_11 {dimension_numbers = #tpu.dot_dimension_numbers<[1], [0], [0], [1], [0, 0, 1, 1], [], []>} : vector<48x16xf32>, vector<16x16xf32>, vector<48x16xf32> -> vector<48x16xf32>
    %13 = tpu.concatenate %10, %12 in 1 : vector<48x16xf32>, vector<48x16xf32> -> vector<48x32xf32>
    %cst_12 = arith.constant dense<0.000000e+00> : vector<48x32xf32>
    %14 = tpu.matmul %2, %13, %cst_12 {dimension_numbers = #tpu.dot_dimension_numbers<[1], [0], [0], [1], [0, 0, 1, 1], [], []>} : vector<48x48xf32>, vector<48x32xf32>, vector<48x32xf32> -> vector<48x32xf32>
    %15 = vector.extract_strided_slice %14 {offsets = [0, 0], sizes = [48, 16], strides = [1, 1]} : vector<48x32xf32> to vector<48x16xf32>
    %16 = vector.extract_strided_slice %14 {offsets = [0, 16], sizes = [48, 16], strides = [1, 1]} : vector<48x32xf32> to vector<48x16xf32>
    %17 = arith.addf %15, %16 : vector<48x16xf32>
    %cst_13 = arith.constant 5.000000e-01 : f32
    %18 = vector.broadcast %cst_13 : f32 to vector<48x16xf32>
    %19 = arith.mulf %17, %18 : vector<48x16xf32>
    %20 = arith.subf %15, %19 : vector<48x16xf32>
    %21 = arith.subf %16, %19 : vector<48x16xf32>
    %22 = arith.mulf %20, %20 : vector<48x16xf32>
    %23 = arith.mulf %21, %21 : vector<48x16xf32>
    %24 = arith.addf %22, %23 : vector<48x16xf32>
    %cst_14 = arith.constant 5.000000e-01 : f32
    %25 = vector.broadcast %cst_14 : f32 to vector<48x16xf32>
    %26 = arith.mulf %24, %25 : vector<48x16xf32>
    %cst_15 = arith.constant 9.99999974E-6 : f32
    %27 = vector.broadcast %cst_15 : f32 to vector<48x16xf32>
    %28 = arith.addf %26, %27 : vector<48x16xf32>
    %29 = math.rsqrt %28 : vector<48x16xf32>
    %30 = arith.mulf %6, %29 : vector<48x16xf32>
    %31 = arith.mulf %20, %30 : vector<48x16xf32>
    %32 = arith.addf %31, %8 : vector<48x16xf32>
    %33 = math.tanh %32 : vector<48x16xf32>
    %34 = arith.mulf %21, %30 : vector<48x16xf32>
    %35 = arith.addf %34, %8 : vector<48x16xf32>
    %36 = math.tanh %35 : vector<48x16xf32>
    %37 = tpu.concatenate %33, %36 in 1 : vector<48x16xf32>, vector<48x16xf32> -> vector<48x32xf32>
    %c1 = arith.constant 1 : index
    %c0_16 = arith.constant 0 : index
    %c0_17 = arith.constant 0 : index
    %38 = vector.load %arg1[%c1, %c0_16, %c0_17] : memref<2x48x48xf32, #tpu.memory_space<vmem>>, vector<1x48x48xf32>
    %39 = vector.shape_cast %38 : vector<1x48x48xf32> to vector<48x48xf32>
    %c1_18 = arith.constant 1 : index
    %c0_19 = arith.constant 0 : index
    %c0_20 = arith.constant 0 : index
    %40 = vector.load %arg2[%c1_18, %c0_19, %c0_20] : memref<2x112x16xf32, #tpu.memory_space<vmem>>, vector<1x16x16xf32>
    %41 = vector.shape_cast %40 : vector<1x16x16xf32> to vector<16x16xf32>
    %c1_21 = arith.constant 1 : index
    %c16_22 = arith.constant 16 : index
    %c0_23 = arith.constant 0 : index
    %42 = vector.load %arg2[%c1_21, %c16_22, %c0_23] : memref<2x112x16xf32, #tpu.memory_space<vmem>>, vector<1x48x16xf32>
    %43 = vector.shape_cast %42 : vector<1x48x16xf32> to vector<48x16xf32>
    %c1_24 = arith.constant 1 : index
    %c64_25 = arith.constant 64 : index
    %c0_26 = arith.constant 0 : index
    %44 = vector.load %arg2[%c1_24, %c64_25, %c0_26] : memref<2x112x16xf32, #tpu.memory_space<vmem>>, vector<1x48x16xf32>
    %45 = vector.shape_cast %44 : vector<1x48x16xf32> to vector<48x16xf32>
    %46 = vector.extract_strided_slice %37 {offsets = [0, 0], sizes = [48, 16], strides = [1, 1]} : vector<48x32xf32> to vector<48x16xf32>
    %cst_27 = arith.constant dense<0.000000e+00> : vector<48x16xf32>
    %47 = tpu.matmul %46, %41, %cst_27 {dimension_numbers = #tpu.dot_dimension_numbers<[1], [0], [0], [1], [0, 0, 1, 1], [], []>} : vector<48x16xf32>, vector<16x16xf32>, vector<48x16xf32> -> vector<48x16xf32>
    %48 = vector.extract_strided_slice %37 {offsets = [0, 16], sizes = [48, 16], strides = [1, 1]} : vector<48x32xf32> to vector<48x16xf32>
    %cst_28 = arith.constant dense<0.000000e+00> : vector<48x16xf32>
    %49 = tpu.matmul %48, %41, %cst_28 {dimension_numbers = #tpu.dot_dimension_numbers<[1], [0], [0], [1], [0, 0, 1, 1], [], []>} : vector<48x16xf32>, vector<16x16xf32>, vector<48x16xf32> -> vector<48x16xf32>
    %50 = tpu.concatenate %47, %49 in 1 : vector<48x16xf32>, vector<48x16xf32> -> vector<48x32xf32>
    %cst_29 = arith.constant dense<0.000000e+00> : vector<48x32xf32>
    %51 = tpu.matmul %39, %50, %cst_29 {dimension_numbers = #tpu.dot_dimension_numbers<[1], [0], [0], [1], [0, 0, 1, 1], [], []>} : vector<48x48xf32>, vector<48x32xf32>, vector<48x32xf32> -> vector<48x32xf32>
    %52 = vector.extract_strided_slice %51 {offsets = [0, 0], sizes = [48, 16], strides = [1, 1]} : vector<48x32xf32> to vector<48x16xf32>
    %53 = vector.extract_strided_slice %51 {offsets = [0, 16], sizes = [48, 16], strides = [1, 1]} : vector<48x32xf32> to vector<48x16xf32>
    %54 = arith.addf %52, %53 : vector<48x16xf32>
    %cst_30 = arith.constant 5.000000e-01 : f32
    %55 = vector.broadcast %cst_30 : f32 to vector<48x16xf32>
    %56 = arith.mulf %54, %55 : vector<48x16xf32>
    %57 = arith.subf %52, %56 : vector<48x16xf32>
    %58 = arith.subf %53, %56 : vector<48x16xf32>
    %59 = arith.mulf %57, %57 : vector<48x16xf32>
    %60 = arith.mulf %58, %58 : vector<48x16xf32>
    %61 = arith.addf %59, %60 : vector<48x16xf32>
    %cst_31 = arith.constant 5.000000e-01 : f32
    %62 = vector.broadcast %cst_31 : f32 to vector<48x16xf32>
    %63 = arith.mulf %61, %62 : vector<48x16xf32>
    %cst_32 = arith.constant 9.99999974E-6 : f32
    %64 = vector.broadcast %cst_32 : f32 to vector<48x16xf32>
    %65 = arith.addf %63, %64 : vector<48x16xf32>
    %66 = math.rsqrt %65 : vector<48x16xf32>
    %67 = arith.mulf %43, %66 : vector<48x16xf32>
    %68 = arith.mulf %57, %67 : vector<48x16xf32>
    %69 = arith.addf %68, %45 : vector<48x16xf32>
    %70 = math.tanh %69 : vector<48x16xf32>
    %71 = arith.mulf %58, %67 : vector<48x16xf32>
    %72 = arith.addf %71, %45 : vector<48x16xf32>
    %73 = math.tanh %72 : vector<48x16xf32>
    %74 = tpu.concatenate %70, %73 in 1 : vector<48x16xf32>, vector<48x16xf32> -> vector<48x32xf32>
    %75 = arith.addf %74, %0 : vector<48x32xf32>
    %c0_33 = arith.constant 0 : index
    %c0_34 = arith.constant 0 : index
    %76 = vector.load %arg3[%c0_33, %c0_34] : memref<48x32xf32, #tpu.memory_space<vmem>>, vector<48x32xf32>
    tpu.vector_store %arg3[%c0_33, %c0_34], %75 {strides = array<i32>} : memref<48x32xf32, #tpu.memory_space<vmem>>, vector<48x32xf32>,
    return
  }
}

</mosaic_0001>

<llo_original>
// kernel: tpu_custom_call.1
$region0: #{tpu_custom_call.1}
  #allocation0 [shape = 'u32[]', space=smem, size = 0x4, offset = 0x4, fixed_abs, tag = 'smem constant byte address 0x4 - core index']
  #allocation1 [shape = 'u32[72,128]{1,0:T(1,128)}', space=vmem, size = 0x9000, scoped, tag = 'internal scratch']
  %s0 = inlined_call_operand.vmem [shape: f32[48,32], index: 0, kind: input, shape index: {}]
  %s1 = inlined_call_operand.vmem [shape: f32[2,48,48], index: 1, kind: input, shape index: {}]
  %s2 = inlined_call_operand.vmem [shape: f32[2,112,16], index: 2, kind: input, shape index: {}]
  %s3 = inlined_call_operand.vmem [shape: f32[48,32], index: 3, kind: output, shape index: {}]
  %s4 = sld [smem:[#allocation0]]
  $region22: #{tpu_custom_call.1} parent=0
    _
  %s6 = ssub.s32 1, %s4
  %s7 = scalar_select 0, %s6, %s4
  // Predicated region
  $region2: #{tpu_custom_call.1} parent=0 // pred_check
    _
  $region3: #{tpu_custom_call.1} parent=0 // pred_check_branch
    %9 = sbr.rel (0) target = $region5
  $region4: #{tpu_custom_call.1} parent=0 // pred_region
    _
  $region5: #{tpu_custom_call.1} parent=0 // pred_fallthru
    _
  // Predicated region
  $region6: #{tpu_custom_call.1} parent=0 // pred_check
    _
  $region7: #{tpu_custom_call.1} parent=0 // pred_check_branch
    %11 = sbr.rel (0) target = $region9
  $region8: #{tpu_custom_call.1} parent=0 // pred_region
    _
  $region9: #{tpu_custom_call.1} parent=0 // pred_fallthru
    _
  // Predicated region
  $region10: #{tpu_custom_call.1} parent=0 // pred_check
    _
  $region11: #{tpu_custom_call.1} parent=0 // pred_check_branch
    %13 = sbr.rel (0) target = $region13
  $region12: #{tpu_custom_call.1} parent=0 // pred_region
    _
  $region13: #{tpu_custom_call.1} parent=0 // pred_fallthru
    _
  %v14 = vld [vmem:[%s0] sm:$0xff]
  %v15 = vld [vmem:[%s0 + $0x8] sm:$0xff]
  %v16 = vld [vmem:[%s0 + $0x10] sm:$0xff]
  %v17 = vld [vmem:[%s0 + $0x18] sm:$0xff]
  %v18 = vld [vmem:[%s0 + $0x20] sm:$0xff]
  %v19 = vld [vmem:[%s0 + $0x28] sm:$0xff]
  %v20 = vld [vmem:[%s1] sm:$0xff]
  %v21 = vld [vmem:[%s1 + $0x8] sm:$0xff]
  %v22 = vld [vmem:[%s1 + $0x10] sm:$0xff]
  %v23 = vld [vmem:[%s1 + $0x18] sm:$0xff]
  %v24 = vld [vmem:[%s1 + $0x20] sm:$0xff]
  %v25 = vld [vmem:[%s1 + $0x28] sm:$0xff]
  %v26 = vld [vmem:[%s2] sm:$0xff]
  %v27 = vld [vmem:[%s2 + $0x8] sm:$0xff]
  %v28 = vld [vmem:[%s2 + $0x10] sm:$0xff]
  %v29 = vld [vmem:[%s2 + $0x18] sm:$0xff]
  %v30 = vld [vmem:[%s2 + $0x20] sm:$0xff]
  %v31 = vld [vmem:[%s2 + $0x28] sm:$0xff]
  %v32 = vld [vmem:[%s2 + $0x30] sm:$0xff]
  %v33 = vld [vmem:[%s2 + $0x38] sm:$0xff]
  %v34 = vld [vmem:[%s2 + $0x40] sm:$0xff]
  %v35 = vld [vmem:[%s2 + $0x48] sm:$0xff]
  %v36 = vld [vmem:[%s2 + $0x50] sm:$0xff]
  %v37 = vld [vmem:[%s2 + $0x58] sm:$0xff]
  %v38 = vld [vmem:[%s2 + $0x60] sm:$0xff]
  %v39 = vld [vmem:[%s2 + $0x68] sm:$0xff]
  %vm40 = vcmask 130048
  %v42 = vsel %vm40, %v14, 0
  %v45 = vsel %vm40, %v15, 0
  %v48 = vsel %vm40, %v16, 0
  %v51 = vsel %vm40, %v17, 0
  %v54 = vsel %vm40, %v18, 0
  %v57 = vsel %vm40, %v19, 0
  %59 = vmatpush.msra.mxu0 0.0
  %60 = vmatpush.msra.mxu0 0.0
  %61 = vmatpush.msra.mxu0 0.0
  %62 = vmatpush.msra.mxu0 0.0
  %63 = vmatpush.msra.mxu0 0.0
  %64 = vmatpush.msra.mxu0 0.0
  %65 = vmatpush.msra.mxu0 0.0
  %66 = vmatpush.msra.mxu0 0.0
  %67 = vmatpush.msra.mxu0 0.0
  %68 = vmatpush.msra.mxu0 0.0
  %69 = vmatpush.msra.mxu0 0.0
  %70 = vmatpush.msra.mxu0 0.0
  %71 = vmatpush.msra.mxu0 0.0
  %72 = vmatpush.msra.mxu0 0.0
  %73 = vmatpush.msra.mxu0 %v27
  %74 = vmatpush.msra.mxu0 %v26
  %75 = vmatmul.f32.gmra.mxu0 %v42
  %v76 = vpop.f32.mrf.mxu0
  %v77 = vadd.f32 0.0, %v76
  %78 = vmatmul.f32.gmra.mxu0 %v45
  %v79 = vpop.f32.mrf.mxu0
  %v80 = vadd.f32 0.0, %v79
  %81 = vmatmul.f32.gmra.mxu0 %v48
  %v82 = vpop.f32.mrf.mxu0
  %v83 = vadd.f32 0.0, %v82
  %84 = vmatmul.f32.gmra.mxu0 %v51
  %v85 = vpop.f32.mrf.mxu0
  %v86 = vadd.f32 0.0, %v85
  %87 = vmatmul.f32.gmra.mxu0 %v54
  %v88 = vpop.f32.mrf.mxu0
  %v89 = vadd.f32 0.0, %v88
  %90 = vmatmul.f32.gmra.mxu0 %v57
  %v91 = vpop.f32.mrf.mxu0
  %v92 = vadd.f32 0.0, %v91
  %93 = vdwg.mxu0
  %94 = vrot.lane.b32.xlu0 %v14, 112
  %v95 = vpop.permute.xlu0 %94
  %96 = vrot.lane.b32.xlu0 %v15, 112
  %v97 = vpop.permute.xlu0 %96
  %98 = vrot.lane.b32.xlu0 %v16, 112
  %v99 = vpop.permute.xlu0 %98
  %100 = vrot.lane.b32.xlu0 %v17, 112
  %v101 = vpop.permute.xlu0 %100
  %102 = vrot.lane.b32.xlu0 %v18, 112
  %v103 = vpop.permute.xlu0 %102
  %104 = vrot.lane.b32.xlu0 %v19, 112
  %v105 = vpop.permute.xlu0 %104
  %v106 = vsel %vm40, %v95, 0
  %v108 = vsel %vm40, %v97, 0
  %v110 = vsel %vm40, %v99, 0
  %v112 = vsel %vm40, %v101, 0
  %v114 = vsel %vm40, %v103, 0
  %v116 = vsel %vm40, %v105, 0
  %118 = vmatpush.msra.mxu0 0.0
  %119 = vmatpush.msra.mxu0 0.0
  %120 = vmatpush.msra.mxu0 0.0
  %121 = vmatpush.msra.mxu0 0.0
  %122 = vmatpush.msra.mxu0 0.0
  %123 = vmatpush.msra.mxu0 0.0
  %124 = vmatpush.msra.mxu0 0.0
  %125 = vmatpush.msra.mxu0 0.0
  %126 = vmatpush.msra.mxu0 0.0
  %127 = vmatpush.msra.mxu0 0.0
  %128 = vmatpush.msra.mxu0 0.0
  %129 = vmatpush.msra.mxu0 0.0
  %130 = vmatpush.msra.mxu0 0.0
  %131 = vmatpush.msra.mxu0 0.0
  %132 = vmatpush.msra.mxu0 %v27
  %133 = vmatpush.msra.mxu0 %v26
  %134 = vmatmul.f32.gmra.mxu0 %v106
  %v135 = vpop.f32.mrf.mxu0
  %v136 = vadd.f32 0.0, %v135
  %137 = vmatmul.f32.gmra.mxu0 %v108
  %v138 = vpop.f32.mrf.mxu0
  %v139 = vadd.f32 0.0, %v138
  %140 = vmatmul.f32.gmra.mxu0 %v110
  %v141 = vpop.f32.mrf.mxu0
  %v142 = vadd.f32 0.0, %v141
  %143 = vmatmul.f32.gmra.mxu0 %v112
  %v144 = vpop.f32.mrf.mxu0
  %v145 = vadd.f32 0.0, %v144
  %146 = vmatmul.f32.gmra.mxu0 %v114
  %v147 = vpop.f32.mrf.mxu0
  %v148 = vadd.f32 0.0, %v147
  %149 = vmatmul.f32.gmra.mxu0 %v116
  %v150 = vpop.f32.mrf.mxu0
  %v151 = vadd.f32 0.0, %v150
  %152 = vdwg.mxu0
  %159 = vrot.lane.b32.xlu0 %v136, 16
  %v160 = vpop.permute.xlu0 %159
  %161 = vrot.lane.b32.xlu0 %v139, 16
  %v162 = vpop.permute.xlu0 %161
  %163 = vrot.lane.b32.xlu0 %v142, 16
  %v164 = vpop.permute.xlu0 %163
  %165 = vrot.lane.b32.xlu0 %v145, 16
  %v166 = vpop.permute.xlu0 %165
  %167 = vrot.lane.b32.xlu0 %v148, 16
  %v168 = vpop.permute.xlu0 %167
  %169 = vrot.lane.b32.xlu0 %v151, 16
  %v170 = vpop.permute.xlu0 %169
  %v177 = vsel %vm40, %v77, %v160
  %v178 = vsel %vm40, %v80, %v162
  %v179 = vsel %vm40, %v83, %v164
  %v180 = vsel %vm40, %v86, %v166
  %v181 = vsel %vm40, %v89, %v168
  %v182 = vsel %vm40, %v92, %v170
  %vm183 = vcmask 392192
  %v185 = vsel %vm183, %v20, 0
  %v188 = vsel %vm183, %v21, 0
  %v191 = vsel %vm183, %v22, 0
  %v194 = vsel %vm183, %v23, 0
  %v197 = vsel %vm183, %v24, 0
  %v200 = vsel %vm183, %v25, 0
  %202 = vmatpush.msra.mxu0 0.0
  %203 = vmatpush.msra.mxu0 0.0
  %204 = vmatpush.msra.mxu0 0.0
  %205 = vmatpush.msra.mxu0 0.0
  %206 = vmatpush.msra.mxu0 0.0
  %207 = vmatpush.msra.mxu0 0.0
  %208 = vmatpush.msra.mxu0 0.0
  %209 = vmatpush.msra.mxu0 0.0
  %210 = vmatpush.msra.mxu0 0.0
  %211 = vmatpush.msra.mxu0 0.0
  %212 = vmatpush.msra.mxu0 %v182
  %213 = vmatpush.msra.mxu0 %v181
  %214 = vmatpush.msra.mxu0 %v180
  %215 = vmatpush.msra.mxu0 %v179
  %216 = vmatpush.msra.mxu0 %v178
  %217 = vmatpush.msra.mxu0 %v177
  %218 = vmatmul.f32.gmra.mxu0 %v185
  %v219 = vpop.f32.mrf.mxu0
  %v220 = vadd.f32 0.0, %v219
  %221 = vmatmul.f32.gmra.mxu0 %v188
  %v222 = vpop.f32.mrf.mxu0
  %v223 = vadd.f32 0.0, %v222
  %224 = vmatmul.f32.gmra.mxu0 %v191
  %v225 = vpop.f32.mrf.mxu0
  %v226 = vadd.f32 0.0, %v225
  %227 = vmatmul.f32.gmra.mxu0 %v194
  %v228 = vpop.f32.mrf.mxu0
  %v229 = vadd.f32 0.0, %v228
  %230 = vmatmul.f32.gmra.mxu0 %v197
  %v231 = vpop.f32.mrf.mxu0
  %v232 = vadd.f32 0.0, %v231
  %233 = vmatmul.f32.gmra.mxu0 %v200
  %v234 = vpop.f32.mrf.mxu0
  %v235 = vadd.f32 0.0, %v234
  %236 = vdwg.mxu0
  %243 = vrot.lane.b32.xlu0 %v220, 112
  %v244 = vpop.permute.xlu0 %243
  %245 = vrot.lane.b32.xlu0 %v223, 112
  %v246 = vpop.permute.xlu0 %245
  %247 = vrot.lane.b32.xlu0 %v226, 112
  %v248 = vpop.permute.xlu0 %247
  %249 = vrot.lane.b32.xlu0 %v229, 112
  %v250 = vpop.permute.xlu0 %249
  %251 = vrot.lane.b32.xlu0 %v232, 112
  %v252 = vpop.permute.xlu0 %251
  %253 = vrot.lane.b32.xlu0 %v235, 112
  %v254 = vpop.permute.xlu0 %253
  %v261 = vadd.f32 %v220, %v244
  %v262 = vadd.f32 %v223, %v246
  %v263 = vadd.f32 %v226, %v248
  %v264 = vadd.f32 %v229, %v250
  %v265 = vadd.f32 %v232, %v252
  %v266 = vadd.f32 %v235, %v254
  %v267 = vmul.f32 %v261, 0.5
  %v268 = vmul.f32 %v262, 0.5
  %v269 = vmul.f32 %v263, 0.5
  %v270 = vmul.f32 %v264, 0.5
  %v271 = vmul.f32 %v265, 0.5
  %v272 = vmul.f32 %v266, 0.5
  %v273 = vsub.f32 %v220, %v267
  %v274 = vsub.f32 %v223, %v268
  %v275 = vsub.f32 %v226, %v269
  %v276 = vsub.f32 %v229, %v270
  %v277 = vsub.f32 %v232, %v271
  %v278 = vsub.f32 %v235, %v272
  %285 = vrot.lane.b32.xlu0 %v267, 16
  %v286 = vpop.permute.xlu0 %285
  %287 = vrot.lane.b32.xlu0 %v268, 16
  %v288 = vpop.permute.xlu0 %287
  %289 = vrot.lane.b32.xlu0 %v269, 16
  %v290 = vpop.permute.xlu0 %289
  %291 = vrot.lane.b32.xlu0 %v270, 16
  %v292 = vpop.permute.xlu0 %291
  %293 = vrot.lane.b32.xlu0 %v271, 16
  %v294 = vpop.permute.xlu0 %293
  %295 = vrot.lane.b32.xlu0 %v272, 16
  %v296 = vpop.permute.xlu0 %295
  %v303 = vsub.f32 %v220, %v286
  %v304 = vsub.f32 %v223, %v288
  %v305 = vsub.f32 %v226, %v290
  %v306 = vsub.f32 %v229, %v292
  %v307 = vsub.f32 %v232, %v294
  %v308 = vsub.f32 %v235, %v296
  %v309 = vmul.f32 %v273, %v273
  %v310 = vmul.f32 %v274, %v274
  %v311 = vmul.f32 %v275, %v275
  %v312 = vmul.f32 %v276, %v276
  %v313 = vmul.f32 %v277, %v277
  %v314 = vmul.f32 %v278, %v278
  %v315 = vmul.f32 %v303, %v303
  %v316 = vmul.f32 %v304, %v304
  %v317 = vmul.f32 %v305, %v305
  %v318 = vmul.f32 %v306, %v306
  %v319 = vmul.f32 %v307, %v307
  %v320 = vmul.f32 %v308, %v308
  %327 = vrot.lane.b32.xlu0 %v315, 112
  %v328 = vpop.permute.xlu0 %327
  %329 = vrot.lane.b32.xlu0 %v316, 112
  %v330 = vpop.permute.xlu0 %329
  %331 = vrot.lane.b32.xlu0 %v317, 112
  %v332 = vpop.permute.xlu0 %331
  %333 = vrot.lane.b32.xlu0 %v318, 112
  %v334 = vpop.permute.xlu0 %333
  %335 = vrot.lane.b32.xlu0 %v319, 112
  %v336 = vpop.permute.xlu0 %335
  %337 = vrot.lane.b32.xlu0 %v320, 112
  %v338 = vpop.permute.xlu0 %337
  %v345 = vadd.f32 %v309, %v328
  %v346 = vadd.f32 %v310, %v330
  %v347 = vadd.f32 %v311, %v332
  %v348 = vadd.f32 %v312, %v334
  %v349 = vadd.f32 %v313, %v336
  %v350 = vadd.f32 %v314, %v338
  %v351 = vmul.f32 %v345, 0.5
  %v352 = vmul.f32 %v346, 0.5
  %v353 = vmul.f32 %v347, 0.5
  %v354 = vmul.f32 %v348, 0.5
  %v355 = vmul.f32 %v349, 0.5
  %v356 = vmul.f32 %v350, 0.5
  %v357 = vadd.f32 %v351, 1e-05
  %v358 = vadd.f32 %v352, 1e-05
  %v359 = vadd.f32 %v353, 1e-05
  %v360 = vadd.f32 %v354, 1e-05
  %v361 = vadd.f32 %v355, 1e-05
  %v362 = vadd.f32 %v356, 1e-05
  %v363 = vrsqrt.pop %v357
  %v364 = vmul.f32 %v363, %v357
  %v365 = vmul.f32 %v364, %v363
  %v366 = vmul.f32 0.5, %v365
  %v367 = vsub.f32 1.5, %v366
  %v368 = vmul.f32 %v363, %v367
  %vm369 = vweird.f32 %v357
  %vm370 = vweird.f32 %v363
  %vm371 = vmor %vm369, %vm370
  %v372 = vsel %vm371, %v363, %v368
  %v373 = vrsqrt.pop %v358
  %v374 = vmul.f32 %v373, %v358
  %v375 = vmul.f32 %v374, %v373
  %v376 = vmul.f32 0.5, %v375
  %v377 = vsub.f32 1.5, %v376
  %v378 = vmul.f32 %v373, %v377
  %vm379 = vweird.f32 %v358
  %vm380 = vweird.f32 %v373
  %vm381 = vmor %vm379, %vm380
  %v382 = vsel %vm381, %v373, %v378
  %v383 = vrsqrt.pop %v359
  %v384 = vmul.f32 %v383, %v359
  %v385 = vmul.f32 %v384, %v383
  %v386 = vmul.f32 0.5, %v385
  %v387 = vsub.f32 1.5, %v386
  %v388 = vmul.f32 %v383, %v387
  %vm389 = vweird.f32 %v359
  %vm390 = vweird.f32 %v383
  %vm391 = vmor %vm389, %vm390
  %v392 = vsel %vm391, %v383, %v388
  %v393 = vrsqrt.pop %v360
  %v394 = vmul.f32 %v393, %v360
  %v395 = vmul.f32 %v394, %v393
  %v396 = vmul.f32 0.5, %v395
  %v397 = vsub.f32 1.5, %v396
  %v398 = vmul.f32 %v393, %v397
  %vm399 = vweird.f32 %v360
  %vm400 = vweird.f32 %v393
  %vm401 = vmor %vm399, %vm400
  %v402 = vsel %vm401, %v393, %v398
  %v403 = vrsqrt.pop %v361
  %v404 = vmul.f32 %v403, %v361
  %v405 = vmul.f32 %v404, %v403
  %v406 = vmul.f32 0.5, %v405
  %v407 = vsub.f32 1.5, %v406
  %v408 = vmul.f32 %v403, %v407
  %vm409 = vweird.f32 %v361
  %vm410 = vweird.f32 %v403
  %vm411 = vmor %vm409, %vm410
  %v412 = vsel %vm411, %v403, %v408
  %v413 = vrsqrt.pop %v362
  %v414 = vmul.f32 %v413, %v362
  %v415 = vmul.f32 %v414, %v413
  %v416 = vmul.f32 0.5, %v415
  %v417 = vsub.f32 1.5, %v416
  %v418 = vmul.f32 %v413, %v417
  %vm419 = vweird.f32 %v362
  %vm420 = vweird.f32 %v413
  %vm421 = vmor %vm419, %vm420
  %v422 = vsel %vm421, %v413, %v418
  %v423 = vmul.f32 %v28, %v372
  %v424 = vmul.f32 %v29, %v382
  %v425 = vmul.f32 %v30, %v392
  %v426 = vmul.f32 %v31, %v402
  %v427 = vmul.f32 %v32, %v412
  %v428 = vmul.f32 %v33, %v422
  %v429 = vmul.f32 %v273, %v423
  %v430 = vmul.f32 %v274, %v424
  %v431 = vmul.f32 %v275, %v425
  %v432 = vmul.f32 %v276, %v426
  %v433 = vmul.f32 %v277, %v427
  %v434 = vmul.f32 %v278, %v428
  %v435 = vadd.f32 %v429, %v34
  %v436 = vadd.f32 %v430, %v35
  %v437 = vadd.f32 %v431, %v36
  %v438 = vadd.f32 %v432, %v37
  %v439 = vadd.f32 %v433, %v38
  %v440 = vadd.f32 %v434, %v39
  %v441 = vtanh.pop %v435
  %v442 = vtanh.pop %v436
  %v443 = vtanh.pop %v437
  %v444 = vtanh.pop %v438
  %v445 = vtanh.pop %v439
  %v446 = vtanh.pop %v440
  %453 = vrot.lane.b32.xlu0 %v423, 16
  %v454 = vpop.permute.xlu0 %453
  %455 = vrot.lane.b32.xlu0 %v424, 16
  %v456 = vpop.permute.xlu0 %455
  %457 = vrot.lane.b32.xlu0 %v425, 16
  %v458 = vpop.permute.xlu0 %457
  %459 = vrot.lane.b32.xlu0 %v426, 16
  %v460 = vpop.permute.xlu0 %459
  %461 = vrot.lane.b32.xlu0 %v427, 16
  %v462 = vpop.permute.xlu0 %461
  %463 = vrot.lane.b32.xlu0 %v428, 16
  %v464 = vpop.permute.xlu0 %463
  %v471 = vmul.f32 %v303, %v454
  %v472 = vmul.f32 %v304, %v456
  %v473 = vmul.f32 %v305, %v458
  %v474 = vmul.f32 %v306, %v460
  %v475 = vmul.f32 %v307, %v462
  %v476 = vmul.f32 %v308, %v464
  %483 = vrot.lane.b32.xlu0 %v34, 16
  %v484 = vpop.permute.xlu0 %483
  %485 = vrot.lane.b32.xlu0 %v35, 16
  %v486 = vpop.permute.xlu0 %485
  %487 = vrot.lane.b32.xlu0 %v36, 16
  %v488 = vpop.permute.xlu0 %487
  %489 = vrot.lane.b32.xlu0 %v37, 16
  %v490 = vpop.permute.xlu0 %489
  %491 = vrot.lane.b32.xlu0 %v38, 16
  %v492 = vpop.permute.xlu0 %491
  %493 = vrot.lane.b32.xlu0 %v39, 16
  %v494 = vpop.permute.xlu0 %493
  %v501 = vadd.f32 %v471, %v484
  %v502 = vadd.f32 %v472, %v486
  %v503 = vadd.f32 %v473, %v488
  %v504 = vadd.f32 %v474, %v490
  %v505 = vadd.f32 %v475, %v492
  %v506 = vadd.f32 %v476, %v494
  %v507 = vtanh.pop %v501
  %v508 = vtanh.pop %v502
  %v509 = vtanh.pop %v503
  %v510 = vtanh.pop %v504
  %v511 = vtanh.pop %v505
  %v512 = vtanh.pop %v506
  %v513 = vsel %vm40, %v441, %v507
  %v514 = vsel %vm40, %v442, %v508
  %v515 = vsel %vm40, %v443, %v509
  %v516 = vsel %vm40, %v444, %v510
  %v517 = vsel %vm40, %v445, %v511
  %v518 = vsel %vm40, %v446, %v512
  %s519 = scalar_lea.vmem %s1, 48
  %v520 = vld [vmem:[%s519] sm:$0xff]
  %v521 = vld [vmem:[%s519 + $0x8] sm:$0xff]
  %v522 = vld [vmem:[%s519 + $0x10] sm:$0xff]
  %v523 = vld [vmem:[%s519 + $0x18] sm:$0xff]
  %v524 = vld [vmem:[%s519 + $0x20] sm:$0xff]
  %v525 = vld [vmem:[%s519 + $0x28] sm:$0xff]
  %s526 = scalar_lea.vmem %s2, 112
  %v527 = vld [vmem:[%s526] sm:$0xff]
  %v528 = vld [vmem:[%s526 + $0x8] sm:$0xff]
  %v529 = vld [vmem:[%s526 + $0x10] sm:$0xff]
  %v530 = vld [vmem:[%s526 + $0x18] sm:$0xff]
  %v531 = vld [vmem:[%s526 + $0x20] sm:$0xff]
  %v532 = vld [vmem:[%s526 + $0x28] sm:$0xff]
  %v533 = vld [vmem:[%s526 + $0x30] sm:$0xff]
  %v534 = vld [vmem:[%s526 + $0x38] sm:$0xff]
  %v535 = vld [vmem:[%s526 + $0x40] sm:$0xff]
  %v536 = vld [vmem:[%s526 + $0x48] sm:$0xff]
  %v537 = vld [vmem:[%s526 + $0x50] sm:$0xff]
  %v538 = vld [vmem:[%s526 + $0x58] sm:$0xff]
  %v539 = vld [vmem:[%s526 + $0x60] sm:$0xff]
  %v540 = vld [vmem:[%s526 + $0x68] sm:$0xff]
  %v542 = vsel %vm40, %v513, 0
  %v545 = vsel %vm40, %v514, 0
  %v548 = vsel %vm40, %v515, 0
  %v551 = vsel %vm40, %v516, 0
  %v554 = vsel %vm40, %v517, 0
  %v557 = vsel %vm40, %v518, 0
  %559 = vmatpush.msra.mxu0 0.0
  %560 = vmatpush.msra.mxu0 0.0
  %561 = vmatpush.msra.mxu0 0.0
  %562 = vmatpush.msra.mxu0 0.0
  %563 = vmatpush.msra.mxu0 0.0
  %564 = vmatpush.msra.mxu0 0.0
  %565 = vmatpush.msra.mxu0 0.0
  %566 = vmatpush.msra.mxu0 0.0
  %567 = vmatpush.msra.mxu0 0.0
  %568 = vmatpush.msra.mxu0 0.0
  %569 = vmatpush.msra.mxu0 0.0
  %570 = vmatpush.msra.mxu0 0.0
  %571 = vmatpush.msra.mxu0 0.0
  %572 = vmatpush.msra.mxu0 0.0
  %573 = vmatpush.msra.mxu0 %v528
  %574 = vmatpush.msra.mxu0 %v527
  %575 = vmatmul.f32.gmra.mxu0 %v542
  %v576 = vpop.f32.mrf.mxu0
  %v577 = vadd.f32 0.0, %v576
  %578 = vmatmul.f32.gmra.mxu0 %v545
  %v579 = vpop.f32.mrf.mxu0
  %v580 = vadd.f32 0.0, %v579
  %581 = vmatmul.f32.gmra.mxu0 %v548
  %v582 = vpop.f32.mrf.mxu0
  %v583 = vadd.f32 0.0, %v582
  %584 = vmatmul.f32.gmra.mxu0 %v551
  %v585 = vpop.f32.mrf.mxu0
  %v586 = vadd.f32 0.0, %v585
  %587 = vmatmul.f32.gmra.mxu0 %v554
  %v588 = vpop.f32.mrf.mxu0
  %v589 = vadd.f32 0.0, %v588
  %590 = vmatmul.f32.gmra.mxu0 %v557
  %v591 = vpop.f32.mrf.mxu0
  %v592 = vadd.f32 0.0, %v591
  %593 = vdwg.mxu0
  %594 = vrot.lane.b32.xlu0 %v513, 112
  %v595 = vpop.permute.xlu0 %594
  %596 = vrot.lane.b32.xlu0 %v514, 112
  %v597 = vpop.permute.xlu0 %596
  %598 = vrot.lane.b32.xlu0 %v515, 112
  %v599 = vpop.permute.xlu0 %598
  %600 = vrot.lane.b32.xlu0 %v516, 112
  %v601 = vpop.permute.xlu0 %600
  %602 = vrot.lane.b32.xlu0 %v517, 112
  %v603 = vpop.permute.xlu0 %602
  %604 = vrot.lane.b32.xlu0 %v518, 112
  %v605 = vpop.permute.xlu0 %604
  %v606 = vsel %vm40, %v595, 0
  %v608 = vsel %vm40, %v597, 0
  %v610 = vsel %vm40, %v599, 0
  %v612 = vsel %vm40, %v601, 0
  %v614 = vsel %vm40, %v603, 0
  %v616 = vsel %vm40, %v605, 0
  %618 = vmatpush.msra.mxu0 0.0
  %619 = vmatpush.msra.mxu0 0.0
  %620 = vmatpush.msra.mxu0 0.0
  %621 = vmatpush.msra.mxu0 0.0
  %622 = vmatpush.msra.mxu0 0.0
  %623 = vmatpush.msra.mxu0 0.0
  %624 = vmatpush.msra.mxu0 0.0
  %625 = vmatpush.msra.mxu0 0.0
  %626 = vmatpush.msra.mxu0 0.0
  %627 = vmatpush.msra.mxu0 0.0
  %628 = vmatpush.msra.mxu0 0.0
  %629 = vmatpush.msra.mxu0 0.0
  %630 = vmatpush.msra.mxu0 0.0
  %631 = vmatpush.msra.mxu0 0.0
  %632 = vmatpush.msra.mxu0 %v528
  %633 = vmatpush.msra.mxu0 %v527
  %634 = vmatmul.f32.gmra.mxu0 %v606
  %v635 = vpop.f32.mrf.mxu0
  %v636 = vadd.f32 0.0, %v635
  %637 = vmatmul.f32.gmra.mxu0 %v608
  %v638 = vpop.f32.mrf.mxu0
  %v639 = vadd.f32 0.0, %v638
  %640 = vmatmul.f32.gmra.mxu0 %v610
  %v641 = vpop.f32.mrf.mxu0
  %v642 = vadd.f32 0.0, %v641
  %643 = vmatmul.f32.gmra.mxu0 %v612
  %v644 = vpop.f32.mrf.mxu0
  %v645 = vadd.f32 0.0, %v644
  %646 = vmatmul.f32.gmra.mxu0 %v614
  %v647 = vpop.f32.mrf.mxu0
  %v648 = vadd.f32 0.0, %v647
  %649 = vmatmul.f32.gmra.mxu0 %v616
  %v650 = vpop.f32.mrf.mxu0
  %v651 = vadd.f32 0.0, %v650
  %652 = vdwg.mxu0
  %659 = vrot.lane.b32.xlu0 %v636, 16
  %v660 = vpop.permute.xlu0 %659
  %661 = vrot.lane.b32.xlu0 %v639, 16
  %v662 = vpop.permute.xlu0 %661
  %663 = vrot.lane.b32.xlu0 %v642, 16
  %v664 = vpop.permute.xlu0 %663
  %665 = vrot.lane.b32.xlu0 %v645, 16
  %v666 = vpop.permute.xlu0 %665
  %667 = vrot.lane.b32.xlu0 %v648, 16
  %v668 = vpop.permute.xlu0 %667
  %669 = vrot.lane.b32.xlu0 %v651, 16
  %v670 = vpop.permute.xlu0 %669
  %v677 = vsel %vm40, %v577, %v660
  %v678 = vsel %vm40, %v580, %v662
  %v679 = vsel %vm40, %v583, %v664
  %v680 = vsel %vm40, %v586, %v666
  %v681 = vsel %vm40, %v589, %v668
  %v682 = vsel %vm40, %v592, %v670
  %v684 = vsel %vm183, %v520, 0
  %v687 = vsel %vm183, %v521, 0
  %v690 = vsel %vm183, %v522, 0
  %v693 = vsel %vm183, %v523, 0
  %v696 = vsel %vm183, %v524, 0
  %v699 = vsel %vm183, %v525, 0
  %701 = vmatpush.msra.mxu0 0.0
  %702 = vmatpush.msra.mxu0 0.0
  %703 = vmatpush.msra.mxu0 0.0
  %704 = vmatpush.msra.mxu0 0.0
  %705 = vmatpush.msra.mxu0 0.0
  %706 = vmatpush.msra.mxu0 0.0
  %707 = vmatpush.msra.mxu0 0.0
  %708 = vmatpush.msra.mxu0 0.0
  %709 = vmatpush.msra.mxu0 0.0
  %710 = vmatpush.msra.mxu0 0.0
  %711 = vmatpush.msra.mxu0 %v682
  %712 = vmatpush.msra.mxu0 %v681
  %713 = vmatpush.msra.mxu0 %v680
  %714 = vmatpush.msra.mxu0 %v679
  %715 = vmatpush.msra.mxu0 %v678
  %716 = vmatpush.msra.mxu0 %v677
  %717 = vmatmul.f32.gmra.mxu0 %v684
  %v718 = vpop.f32.mrf.mxu0
  %v719 = vadd.f32 0.0, %v718
  %720 = vmatmul.f32.gmra.mxu0 %v687
  %v721 = vpop.f32.mrf.mxu0
  %v722 = vadd.f32 0.0, %v721
  %723 = vmatmul.f32.gmra.mxu0 %v690
  %v724 = vpop.f32.mrf.mxu0
  %v725 = vadd.f32 0.0, %v724
  %726 = vmatmul.f32.gmra.mxu0 %v693
  %v727 = vpop.f32.mrf.mxu0
  %v728 = vadd.f32 0.0, %v727
  %729 = vmatmul.f32.gmra.mxu0 %v696
  %v730 = vpop.f32.mrf.mxu0
  %v731 = vadd.f32 0.0, %v730
  %732 = vmatmul.f32.gmra.mxu0 %v699
  %v733 = vpop.f32.mrf.mxu0
  %v734 = vadd.f32 0.0, %v733
  %735 = vdwg.mxu0
  %742 = vrot.lane.b32.xlu0 %v719, 112
  %v743 = vpop.permute.xlu0 %742
  %744 = vrot.lane.b32.xlu0 %v722, 112
  %v745 = vpop.permute.xlu0 %744
  %746 = vrot.lane.b32.xlu0 %v725, 112
  %v747 = vpop.permute.xlu0 %746
  %748 = vrot.lane.b32.xlu0 %v728, 112
  %v749 = vpop.permute.xlu0 %748
  %750 = vrot.lane.b32.xlu0 %v731, 112
  %v751 = vpop.permute.xlu0 %750
  %752 = vrot.lane.b32.xlu0 %v734, 112
  %v753 = vpop.permute.xlu0 %752
  %v760 = vadd.f32 %v719, %v743
  %v761 = vadd.f32 %v722, %v745
  %v762 = vadd.f32 %v725, %v747
  %v763 = vadd.f32 %v728, %v749
  %v764 = vadd.f32 %v731, %v751
  %v765 = vadd.f32 %v734, %v753
  %v766 = vmul.f32 %v760, 0.5
  %v767 = vmul.f32 %v761, 0.5
  %v768 = vmul.f32 %v762, 0.5
  %v769 = vmul.f32 %v763, 0.5
  %v770 = vmul.f32 %v764, 0.5
  %v771 = vmul.f32 %v765, 0.5
  %v772 = vsub.f32 %v719, %v766
  %v773 = vsub.f32 %v722, %v767
  %v774 = vsub.f32 %v725, %v768
  %v775 = vsub.f32 %v728, %v769
  %v776 = vsub.f32 %v731, %v770
  %v777 = vsub.f32 %v734, %v771
  %784 = vrot.lane.b32.xlu0 %v766, 16
  %v785 = vpop.permute.xlu0 %784
  %786 = vrot.lane.b32.xlu0 %v767, 16
  %v787 = vpop.permute.xlu0 %786
  %788 = vrot.lane.b32.xlu0 %v768, 16
  %v789 = vpop.permute.xlu0 %788
  %790 = vrot.lane.b32.xlu0 %v769, 16
  %v791 = vpop.permute.xlu0 %790
  %792 = vrot.lane.b32.xlu0 %v770, 16
  %v793 = vpop.permute.xlu0 %792
  %794 = vrot.lane.b32.xlu0 %v771, 16
  %v795 = vpop.permute.xlu0 %794
  %v802 = vsub.f32 %v719, %v785
  %v803 = vsub.f32 %v722, %v787
  %v804 = vsub.f32 %v725, %v789
  %v805 = vsub.f32 %v728, %v791
  %v806 = vsub.f32 %v731, %v793
  %v807 = vsub.f32 %v734, %v795
  %v808 = vmul.f32 %v772, %v772
  %v809 = vmul.f32 %v773, %v773
  %v810 = vmul.f32 %v774, %v774
  %v811 = vmul.f32 %v775, %v775
  %v812 = vmul.f32 %v776, %v776
  %v813 = vmul.f32 %v777, %v777
  %v814 = vmul.f32 %v802, %v802
  %v815 = vmul.f32 %v803, %v803
  %v816 = vmul.f32 %v804, %v804
  %v817 = vmul.f32 %v805, %v805
  %v818 = vmul.f32 %v806, %v806
  %v819 = vmul.f32 %v807, %v807
  %826 = vrot.lane.b32.xlu0 %v814, 112
  %v827 = vpop.permute.xlu0 %826
  %828 = vrot.lane.b32.xlu0 %v815, 112
  %v829 = vpop.permute.xlu0 %828
  %830 = vrot.lane.b32.xlu0 %v816, 112
  %v831 = vpop.permute.xlu0 %830
  %832 = vrot.lane.b32.xlu0 %v817, 112
  %v833 = vpop.permute.xlu0 %832
  %834 = vrot.lane.b32.xlu0 %v818, 112
  %v835 = vpop.permute.xlu0 %834
  %836 = vrot.lane.b32.xlu0 %v819, 112
  %v837 = vpop.permute.xlu0 %836
  %v844 = vadd.f32 %v808, %v827
  %v845 = vadd.f32 %v809, %v829
  %v846 = vadd.f32 %v810, %v831
  %v847 = vadd.f32 %v811, %v833
  %v848 = vadd.f32 %v812, %v835
  %v849 = vadd.f32 %v813, %v837
  %v850 = vmul.f32 %v844, 0.5
  %v851 = vmul.f32 %v845, 0.5
  %v852 = vmul.f32 %v846, 0.5
  %v853 = vmul.f32 %v847, 0.5
  %v854 = vmul.f32 %v848, 0.5
  %v855 = vmul.f32 %v849, 0.5
  %v856 = vadd.f32 %v850, 1e-05
  %v857 = vadd.f32 %v851, 1e-05
  %v858 = vadd.f32 %v852, 1e-05
  %v859 = vadd.f32 %v853, 1e-05
  %v860 = vadd.f32 %v854, 1e-05
  %v861 = vadd.f32 %v855, 1e-05
  %v862 = vrsqrt.pop %v856
  %v863 = vmul.f32 %v862, %v856
  %v864 = vmul.f32 %v863, %v862
  %v865 = vmul.f32 0.5, %v864
  %v866 = vsub.f32 1.5, %v865
  %v867 = vmul.f32 %v862, %v866
  %vm868 = vweird.f32 %v856
  %vm869 = vweird.f32 %v862
  %vm870 = vmor %vm868, %vm869
  %v871 = vsel %vm870, %v862, %v867
  %v872 = vrsqrt.pop %v857
  %v873 = vmul.f32 %v872, %v857
  %v874 = vmul.f32 %v873, %v872
  %v875 = vmul.f32 0.5, %v874
  %v876 = vsub.f32 1.5, %v875
  %v877 = vmul.f32 %v872, %v876
  %vm878 = vweird.f32 %v857
  %vm879 = vweird.f32 %v872
  %vm880 = vmor %vm878, %vm879
  %v881 = vsel %vm880, %v872, %v877
  %v882 = vrsqrt.pop %v858
  %v883 = vmul.f32 %v882, %v858
  %v884 = vmul.f32 %v883, %v882
  %v885 = vmul.f32 0.5, %v884
  %v886 = vsub.f32 1.5, %v885
  %v887 = vmul.f32 %v882, %v886
  %vm888 = vweird.f32 %v858
  %vm889 = vweird.f32 %v882
  %vm890 = vmor %vm888, %vm889
  %v891 = vsel %vm890, %v882, %v887
  %v892 = vrsqrt.pop %v859
  %v893 = vmul.f32 %v892, %v859
  %v894 = vmul.f32 %v893, %v892
  %v895 = vmul.f32 0.5, %v894
  %v896 = vsub.f32 1.5, %v895
  %v897 = vmul.f32 %v892, %v896
  %vm898 = vweird.f32 %v859
  %vm899 = vweird.f32 %v892
  %vm900 = vmor %vm898, %vm899
  %v901 = vsel %vm900, %v892, %v897
  %v902 = vrsqrt.pop %v860
  %v903 = vmul.f32 %v902, %v860
  %v904 = vmul.f32 %v903, %v902
  %v905 = vmul.f32 0.5, %v904
  %v906 = vsub.f32 1.5, %v905
  %v907 = vmul.f32 %v902, %v906
  %vm908 = vweird.f32 %v860
  %vm909 = vweird.f32 %v902
  %vm910 = vmor %vm908, %vm909
  %v911 = vsel %vm910, %v902, %v907
  %v912 = vrsqrt.pop %v861
  %v913 = vmul.f32 %v912, %v861
  %v914 = vmul.f32 %v913, %v912
  %v915 = vmul.f32 0.5, %v914
  %v916 = vsub.f32 1.5, %v915
  %v917 = vmul.f32 %v912, %v916
  %vm918 = vweird.f32 %v861
  %vm919 = vweird.f32 %v912
  %vm920 = vmor %vm918, %vm919
  %v921 = vsel %vm920, %v912, %v917
  %v922 = vmul.f32 %v529, %v871
  %v923 = vmul.f32 %v530, %v881
  %v924 = vmul.f32 %v531, %v891
  %v925 = vmul.f32 %v532, %v901
  %v926 = vmul.f32 %v533, %v911
  %v927 = vmul.f32 %v534, %v921
  %v928 = vmul.f32 %v772, %v922
  %v929 = vmul.f32 %v773, %v923
  %v930 = vmul.f32 %v774, %v924
  %v931 = vmul.f32 %v775, %v925
  %v932 = vmul.f32 %v776, %v926
  %v933 = vmul.f32 %v777, %v927
  %v934 = vadd.f32 %v928, %v535
  %v935 = vadd.f32 %v929, %v536
  %v936 = vadd.f32 %v930, %v537
  %v937 = vadd.f32 %v931, %v538
  %v938 = vadd.f32 %v932, %v539
  %v939 = vadd.f32 %v933, %v540
  %v940 = vtanh.pop %v934
  %v941 = vtanh.pop %v935
  %v942 = vtanh.pop %v936
  %v943 = vtanh.pop %v937
  %v944 = vtanh.pop %v938
  %v945 = vtanh.pop %v939
  %952 = vrot.lane.b32.xlu0 %v922, 16
  %v953 = vpop.permute.xlu0 %952
  %954 = vrot.lane.b32.xlu0 %v923, 16
  %v955 = vpop.permute.xlu0 %954
  %956 = vrot.lane.b32.xlu0 %v924, 16
  %v957 = vpop.permute.xlu0 %956
  %958 = vrot.lane.b32.xlu0 %v925, 16
  %v959 = vpop.permute.xlu0 %958
  %960 = vrot.lane.b32.xlu0 %v926, 16
  %v961 = vpop.permute.xlu0 %960
  %962 = vrot.lane.b32.xlu0 %v927, 16
  %v963 = vpop.permute.xlu0 %962
  %v970 = vmul.f32 %v802, %v953
  %v971 = vmul.f32 %v803, %v955
  %v972 = vmul.f32 %v804, %v957
  %v973 = vmul.f32 %v805, %v959
  %v974 = vmul.f32 %v806, %v961
  %v975 = vmul.f32 %v807, %v963
  %982 = vrot.lane.b32.xlu0 %v535, 16
  %v983 = vpop.permute.xlu0 %982
  %984 = vrot.lane.b32.xlu0 %v536, 16
  %v985 = vpop.permute.xlu0 %984
  %986 = vrot.lane.b32.xlu0 %v537, 16
  %v987 = vpop.permute.xlu0 %986
  %988 = vrot.lane.b32.xlu0 %v538, 16
  %v989 = vpop.permute.xlu0 %988
  %990 = vrot.lane.b32.xlu0 %v539, 16
  %v991 = vpop.permute.xlu0 %990
  %992 = vrot.lane.b32.xlu0 %v540, 16
  %v993 = vpop.permute.xlu0 %992
  %v1000 = vadd.f32 %v970, %v983
  %v1001 = vadd.f32 %v971, %v985
  %v1002 = vadd.f32 %v972, %v987
  %v1003 = vadd.f32 %v973, %v989
  %v1004 = vadd.f32 %v974, %v991
  %v1005 = vadd.f32 %v975, %v993
  %v1006 = vtanh.pop %v1000
  %v1007 = vtanh.pop %v1001
  %v1008 = vtanh.pop %v1002
  %v1009 = vtanh.pop %v1003
  %v1010 = vtanh.pop %v1004
  %v1011 = vtanh.pop %v1005
  %v1012 = vsel %vm40, %v940, %v1006
  %v1013 = vsel %vm40, %v941, %v1007
  %v1014 = vsel %vm40, %v942, %v1008
  %v1015 = vsel %vm40, %v943, %v1009
  %v1016 = vsel %vm40, %v944, %v1010
  %v1017 = vsel %vm40, %v945, %v1011
  %v1018 = vadd.f32 %v1012, %v14
  %v1019 = vadd.f32 %v1013, %v15
  %v1020 = vadd.f32 %v1014, %v16
  %v1021 = vadd.f32 %v1015, %v17
  %v1022 = vadd.f32 %v1016, %v18
  %v1023 = vadd.f32 %v1017, %v19
  %vm1024 = vcmask 261120
  %1025 = vst.msk [vmem:[%s3] sm:$0xff] %vm1024, %v1018
  %1026 = vst.msk [vmem:[%s3 + $0x8] sm:$0xff] %vm1024, %v1019
  %1027 = vst.msk [vmem:[%s3 + $0x10] sm:$0xff] %vm1024, %v1020
  %1028 = vst.msk [vmem:[%s3 + $0x18] sm:$0xff] %vm1024, %v1021
  %1029 = vst.msk [vmem:[%s3 + $0x20] sm:$0xff] %vm1024, %v1022
  %1030 = vst.msk [vmem:[%s3 + $0x28] sm:$0xff] %vm1024, %v1023
  // Predicated region
  $region14: #{tpu_custom_call.1} parent=0 // pred_check
    _
  $region15: #{tpu_custom_call.1} parent=0 // pred_check_branch
    %1032 = sbr.rel (0) target = $region17
  $region16: #{tpu_custom_call.1} parent=0 // pred_region
    _
  $region17: #{tpu_custom_call.1} parent=0 // pred_fallthru
    _
  // Predicated region
  $region18: #{tpu_custom_call.1} parent=0 // pred_check
    _
  $region19: #{tpu_custom_call.1} parent=0 // pred_check_branch
    %1034 = sbr.rel (0) target = $region21
  $region20: #{tpu_custom_call.1} parent=0 // pred_region
    _
  $region21: #{tpu_custom_call.1} parent=0 // pred_fallthru
    _

</llo_original>
